<compile_context>
chip_gen: v7x
topology: tpu7x:2x2x1
jax: 0.10.0
libtpu: 0.0.40
codegen_flags: <defaults>
</compile_context>

<pallas_src>
import functools

import jax
import jax.numpy as jnp
from jax.experimental import pallas as pl
from jax.experimental.pallas import tpu as pltpu

_EPS = 1e-6        # F.pairwise_distance default eps
_NUM_SHARDS = 2    # v7x has 2 TensorCores per chip; harmless on 1-TC chips


def _vmem_budgets():
    """(scoped_vmem_limit_bytes, double_buffered_tile_budget_bytes)."""
    # Conservative defaults sized for v7x (64 MiB VMEM per TensorCore).
    scoped = 32 * 1024 * 1024
    tile_budget = 20 * 1024 * 1024
    try:
        info = pltpu.get_tpu_info()
        cap = None
        for name in ("vmem_capacity_bytes", "vmem_bytes", "vmem_size_bytes"):
            cap = getattr(info, name, None)
            if cap:
                break
        if cap and cap >= 96 * 1024 * 1024:
            # 128 MiB parts (v5e / v6e): larger tiles amortize per-step overhead.
            scoped = 64 * 1024 * 1024
            tile_budget = 40 * 1024 * 1024
    except Exception:
        pass  # fall back to the v7x-safe settings
    return scoped, tile_budget


def _contrastive_kernel(out1_ref, out2_ref, label_ref, loss_ref, *,
                        margin, batch, tile_b, steps_per_shard, has_pad):
    i = pl.program_id(1)

    # Zero this shard's resident accumulator block once (start of its loop).
    @pl.when(i == 0)
    def _():
        loss_ref[...] = jnp.zeros_like(loss_ref)

    # Upcast in-register (inputs may be bf16 in HBM); all math in f32 on VPU.
    o1 = out1_ref[...].astype(jnp.float32)                    # [TB, D]
    o2 = out2_ref[...].astype(jnp.float32)                    # [TB, D]
    diff = o1 - o2 + _EPS                                     # pairwise_distance eps
    sq_dist = jnp.sum(diff * diff, axis=-1, keepdims=True)    # [TB, 1] lane reduce
    dist = jnp.sqrt(sq_dist)                                  # [TB, 1]

    label = label_ref[...]                                    # [TB, 1] (already f32)
    hinge = jnp.maximum(margin - dist, 0.0)
    per_pair = (1.0 - label) * sq_dist + label * hinge * hinge  # [TB, 1]

    if has_pad:
        # Only emitted when the padded grid coverage exceeds B: mask rows past
        # the true batch (ragged last tile and clamped duplicate tiles).
        c = pl.program_id(0)
        t = c * steps_per_shard + i
        row = jax.lax.broadcasted_iota(jnp.int32, per_pair.shape, 0) + t * tile_b
        per_pair = jnp.where(row < batch, per_pair, 0.0)

    # Broadcast-accumulate the tile sum over the (1,8,128) block; element
    # [0,0,0] (like every other element) holds this shard's running total.
    loss_ref[...] += jnp.sum(per_pair)


def contrastive_loss(out1, out2, label, margin=2.0, tile_b=None):
    """Pallas implementation of ContrastiveLoss.forward.

    out1, out2: [B, D] embeddings (any float dtype; kept in native dtype in HBM)
    label:      [B] or [B, 1] (0 = similar, 1 = dissimilar)
    """
    B, D = out1.shape
    label = label.reshape(B, 1).astype(jnp.float32)   # DMA dtype == compute dtype

    scoped_vmem, tile_budget = _vmem_budgets()

    itemsize = max(jnp.dtype(out1.dtype).itemsize, jnp.dtype(out2.dtype).itemsize)
    d_pad = pl.cdiv(D, 128) * 128
    # Per-row double-buffered VMEM footprint:
    #   inputs : 2 arrays x 2 buffers x lane-padded D x itemsize
    #   label  : 2 buffers x 128 lanes x 4 B   ((tile_b,1) f32 block pads to 128 lanes)
    #   temps  : ~3 f32 full-width temporaries for the upcast / diff chain
    per_row_bytes = 2 * 2 * d_pad * itemsize + 2 * 128 * 4 + 3 * d_pad * 4

    if tile_b is None:
        rows = max(8, (tile_budget // per_row_bytes) // 8 * 8)
        tile_b = min(B, rows)
    tile_b = min(int(tile_b), B)
    if tile_b != B:
        # Partial tiles along the sublane dim must stay 8-aligned.
        tile_b = max(8, (tile_b // 8) * 8)

    num_tiles = pl.cdiv(B, tile_b)
    num_shards = min(_NUM_SHARDS, num_tiles)
    steps = pl.cdiv(num_tiles, num_shards)
    has_pad = (num_shards * steps * tile_b) != B

    def in_map(c, i):
        t = c * steps + i
        # Clamp tiles past the end (shard padding); their rows are masked off.
        return (jnp.minimum(t, num_tiles - 1), 0)

    kernel = functools.partial(
        _contrastive_kernel, margin=float(margin), batch=int(B),
        tile_b=int(tile_b), steps_per_shard=int(steps), has_pad=bool(has_pad))

    bytes_accessed = (out1.size * out1.dtype.itemsize
                      + out2.size * out2.dtype.itemsize
                      + label.size * 4 + num_shards * 8 * 128 * 4)
    cost = pl.CostEstimate(flops=5 * B * D + 10 * B,
                           transcendentals=B,
                           bytes_accessed=int(bytes_accessed))

    partials = pl.pallas_call(
        kernel,
        out_shape=jax.ShapeDtypeStruct((num_shards, 8, 128), jnp.float32),
        grid=(num_shards, steps),
        in_specs=[
            pl.BlockSpec((tile_b, D), in_map),
            pl.BlockSpec((tile_b, D), in_map),
            pl.BlockSpec((tile_b, 1), in_map),
        ],
        # Per-shard resident accumulator block: index depends only on the shard,
        # so each block is written back to HBM exactly once.
        out_specs=pl.BlockSpec((1, 8, 128), lambda c, i: (c, 0, 0)),
        compiler_params=pltpu.CompilerParams(
            dimension_semantics=("parallel", "arbitrary"),
            vmem_limit_bytes=scoped_vmem,
        ),
        cost_estimate=cost,
    )(out1, out2, label)

    # Cross-shard reduction + mean over the true batch size, done in JAX.
    return jnp.sum(partials[:, 0, 0]) * (1.0 / B)


def _reference(out1, out2, label, margin=2.0):
    diff = out1.astype(jnp.float32) - out2.astype(jnp.float32) + _EPS
    sq = jnp.sum(diff * diff, axis=-1, keepdims=True)
    d = jnp.sqrt(sq)
    label = label.reshape(-1, 1).astype(jnp.float32)
    return jnp.mean((1.0 - label) * sq
                    + label * jnp.square(jnp.maximum(margin - d, 0.0)))


if __name__ == "__main__":
    # Small deterministic example.  B=20 with tile_b=8 exercises the 2-shard
    # grid, the resident per-shard accumulators, and the masked ragged coverage.
    B, D = 20, 32
    key = jax.random.PRNGKey(0)
    k1, k2, k3 = jax.random.split(key, 3)
    out1 = jax.random.normal(k1, (B, D), dtype=jnp.float32)
    out2 = jax.random.normal(k2, (B, D), dtype=jnp.float32)
    label = jax.random.bernoulli(k3, 0.5, (B, 1)).astype(jnp.float32)

    ref = _reference(out1, out2, label, margin=2.0)

    # Multi-tile / multi-shard path (2 shards x 2 steps, clamped + masked tail).
    loss = contrastive_loss(out1, out2, label, margin=2.0, tile_b=8)
    jax.block_until_ready(loss)
    assert jnp.allclose(loss, ref, rtol=1e-5, atol=1e-5), (loss, ref)

    # Auto tile size (single whole-batch tile, no mask emitted).
    loss_auto = contrastive_loss(out1, out2, label, margin=2.0)
    jax.block_until_ready(loss_auto)
    assert jnp.allclose(loss_auto, ref, rtol=1e-5, atol=1e-5), (loss_auto, ref)

    # bf16 embeddings stay bf16 in HBM; the kernel upcasts in-register.
    out1_bf = out1.astype(jnp.bfloat16)
    out2_bf = out2.astype(jnp.bfloat16)
    loss_bf = contrastive_loss(out1_bf, out2_bf, label, margin=2.0, tile_b=8)
    jax.block_until_ready(loss_bf)
    ref_bf = _reference(out1_bf, out2_bf, label, margin=2.0)
    assert jnp.allclose(loss_bf, ref_bf, rtol=1e-3, atol=1e-3), (loss_bf, ref_bf)

    print("KERNEL_OK")
</pallas_src>

<mosaic_0001>
module attributes {stable_mosaic.version = 11 : i64} {
  func.func @_contrastive_kernel(%arg0: i32, %arg1: i32, %arg2: memref<8x32xf32, #tpu.memory_space<vmem>>, %arg3: memref<8x32xf32, #tpu.memory_space<vmem>>, %arg4: memref<8x1xf32, #tpu.memory_space<vmem>>, %arg5: memref<1x8x128xf32, #tpu.memory_space<vmem>>) attributes {dimension_semantics = [#tpu.dimension_semantics<parallel>, #tpu.dimension_semantics<arbitrary>], iteration_bounds = array<i64: 2, 2>, scalar_prefetch = 0 : i64, scratch_operands = 0 : i64, tpu.core_type = #tpu.core_type<tc>, window_params = [{transform_indices = @transform_0, window_bounds = array<i64: 8, 32>}, {transform_indices = @transform_1, window_bounds = array<i64: 8, 32>}, {transform_indices = @transform_2, window_bounds = array<i64: 8, 1>}, {transform_indices = @transform_3, window_bounds = array<i64: 1, 8, 128>}]} {
    %c0_i32 = arith.constant 0 : i32
    %0 = arith.cmpi eq, %arg1, %c0_i32 : i32
    %1 = arith.extui %0 : i1 to i32
    %c0_i32_0 = arith.constant 0 : i32
    %2 = arith.cmpi ne, %1, %c0_i32_0 : i32
    scf.if %2 {
      %cst_18 = arith.constant 0.000000e+00 : f32
      %41 = vector.broadcast %cst_18 : f32 to vector<1x8x128xf32>
      %c0_19 = arith.constant 0 : index
      %c0_20 = arith.constant 0 : index
      %c0_21 = arith.constant 0 : index
      %42 = vector.load %arg5[%c0_19, %c0_20, %c0_21] : memref<1x8x128xf32, #tpu.memory_space<vmem>>, vector<1x8x128xf32>
      tpu.vector_store %arg5[%c0_19, %c0_20, %c0_21], %41 {strides = array<i32>} : memref<1x8x128xf32, #tpu.memory_space<vmem>>, vector<1x8x128xf32>,
    } else {
    }
    %c0 = arith.constant 0 : index
    %c0_1 = arith.constant 0 : index
    %3 = vector.load %arg2[%c0, %c0_1] : memref<8x32xf32, #tpu.memory_space<vmem>>, vector<8x32xf32>
    %c0_2 = arith.constant 0 : index
    %c0_3 = arith.constant 0 : index
    %4 = vector.load %arg3[%c0_2, %c0_3] : memref<8x32xf32, #tpu.memory_space<vmem>>, vector<8x32xf32>
    %5 = arith.subf %3, %4 : vector<8x32xf32>
    %cst = arith.constant 9.99999997E-7 : f32
    %6 = vector.broadcast %cst : f32 to vector<8x32xf32>
    %7 = arith.addf %5, %6 : vector<8x32xf32>
    %8 = arith.mulf %7, %7 : vector<8x32xf32>
    %cst_4 = arith.constant dense<0.000000e+00> : vector<8xf32>
    %9 = vector.multi_reduction <add>, %8, %cst_4 [1] : vector<8x32xf32> to vector<8xf32>
    %10 = vector.shape_cast %9 : vector<8xf32> to vector<8x1xf32>
    %11 = math.sqrt %10 : vector<8x1xf32>
    %c0_5 = arith.constant 0 : index
    %c0_6 = arith.constant 0 : index
    %12 = vector.load %arg4[%c0_5, %c0_6] : memref<8x1xf32, #tpu.memory_space<vmem>>, vector<8x1xf32>
    %cst_7 = arith.constant 2.000000e+00 : f32
    %13 = vector.broadcast %cst_7 : f32 to vector<8x1xf32>
    %14 = arith.subf %13, %11 : vector<8x1xf32>
    %cst_8 = arith.constant 0.000000e+00 : f32
    %15 = vector.broadcast %cst_8 : f32 to vector<8x1xf32>
    %16 = arith.maximumf %14, %15 : vector<8x1xf32>
    %cst_9 = arith.constant 1.000000e+00 : f32
    %17 = vector.broadcast %cst_9 : f32 to vector<8x1xf32>
    %18 = arith.subf %17, %12 : vector<8x1xf32>
    %19 = arith.mulf %18, %10 : vector<8x1xf32>
    %20 = arith.mulf %12, %16 : vector<8x1xf32>
    %21 = arith.mulf %20, %16 : vector<8x1xf32>
    %22 = arith.addf %19, %21 : vector<8x1xf32>
    %c2_i32 = arith.constant 2 : i32
    %23 = arith.muli %arg0, %c2_i32 : i32
    %24 = arith.addi %23, %arg1 : i32
    %25 = tpu.iota {dimensions = array<i32: 0>} : vector<8x1xi32>
    %c8_i32 = arith.constant 8 : i32
    %26 = arith.muli %24, %c8_i32 : i32
    %27 = vector.broadcast %26 : i32 to vector<8x1xi32>
    %28 = arith.addi %25, %27 : vector<8x1xi32>
    %c20_i32 = arith.constant 20 : i32
    %29 = vector.broadcast %c20_i32 : i32 to vector<8x1xi32>
    %30 = arith.cmpi slt, %28, %29 : vector<8x1xi32>
    %cst_10 = arith.constant 0.000000e+00 : f32
    %31 = vector.broadcast %cst_10 : f32 to vector<8x1xf32>
    %32 = arith.select %30, %22, %31 : vector<8x1xi1>, vector<8x1xf32>
    %c0_11 = arith.constant 0 : index
    %c0_12 = arith.constant 0 : index
    %c0_13 = arith.constant 0 : index
    %33 = vector.load %arg5[%c0_11, %c0_12, %c0_13] : memref<1x8x128xf32, #tpu.memory_space<vmem>>, vector<1x8x128xf32>
    %34 = vector.shape_cast %32 : vector<8x1xf32> to vector<1x8x1xf32>
    %cst_14 = arith.constant dense<0.000000e+00> : vector<1xf32>
    %35 = vector.multi_reduction <add>, %34, %cst_14 [1, 2] : vector<1x8x1xf32> to vector<1xf32>
    %36 = vector.shape_cast %35 : vector<1xf32> to vector<1x1x1xf32>
    %37 = vector.extract %36[0, 0, 0] : f32 from vector<1x1x1xf32>
    %38 = vector.broadcast %37 : f32 to vector<1x8x128xf32>
    %39 = arith.addf %33, %38 : vector<1x8x128xf32>
    %c0_15 = arith.constant 0 : index
    %c0_16 = arith.constant 0 : index
    %c0_17 = arith.constant 0 : index
    %40 = vector.load %arg5[%c0_15, %c0_16, %c0_17] : memref<1x8x128xf32, #tpu.memory_space<vmem>>, vector<1x8x128xf32>
    tpu.vector_store %arg5[%c0_15, %c0_16, %c0_17], %39 {strides = array<i32>} : memref<1x8x128xf32, #tpu.memory_space<vmem>>, vector<1x8x128xf32>,
    return
  }
  func.func @transform_0(%arg0: i32, %arg1: i32) -> (i32, i32) {
    %c2_i32 = arith.constant 2 : i32
    %0 = arith.muli %arg0, %c2_i32 : i32
    %1 = arith.addi %0, %arg1 : i32
    %c2_i32_0 = arith.constant 2 : i32
    %2 = arith.minsi %1, %c2_i32_0 : i32
    %c0_i32 = arith.constant 0 : i32
    %c0_i32_1 = arith.constant 0 : i32
    return %2, %c0_i32 : i32, i32
  }
  func.func @transform_1(%arg0: i32, %arg1: i32) -> (i32, i32) {
    %c2_i32 = arith.constant 2 : i32
    %0 = arith.muli %arg0, %c2_i32 : i32
    %1 = arith.addi %0, %arg1 : i32
    %c2_i32_0 = arith.constant 2 : i32
    %2 = arith.minsi %1, %c2_i32_0 : i32
    %c0_i32 = arith.constant 0 : i32
    %c0_i32_1 = arith.constant 0 : i32
    return %2, %c0_i32 : i32, i32
  }
  func.func @transform_2(%arg0: i32, %arg1: i32) -> (i32, i32) {
    %c2_i32 = arith.constant 2 : i32
    %0 = arith.muli %arg0, %c2_i32 : i32
    %1 = arith.addi %0, %arg1 : i32
    %c2_i32_0 = arith.constant 2 : i32
    %2 = arith.minsi %1, %c2_i32_0 : i32
    %c0_i32 = arith.constant 0 : i32
    %c0_i32_1 = arith.constant 0 : i32
    return %2, %c0_i32 : i32, i32
  }
  func.func @transform_3(%arg0: i32, %arg1: i32) -> (i32, i32, i32) {
    %c0_i32 = arith.constant 0 : i32
    %c0_i32_0 = arith.constant 0 : i32
    %c0_i32_1 = arith.constant 0 : i32
    return %arg0, %c0_i32, %c0_i32_0 : i32, i32, i32
  }
}

</mosaic_0001>

<llo_original>
// kernel: tpu_custom_call.1
$region0: #{tpu_custom_call.1}
  #allocation0 [shape = 'u32[]', space=smem, size = 0x4, offset = 0x4, fixed_abs, tag = 'smem constant byte address 0x4 - core index']
  #allocation1 [shape = 'u32[144,128]{1,0:T(1,128)}', space=vmem, size = 0x12000, scoped, tag = 'internal scratch']
  %s0 = inlined_call_operand.vmem [shape: f32[20,32], index: 0, kind: input, shape index: {}]
  %s1 = inlined_call_operand.hbm [shape: f32[20,32], index: 1, kind: input, shape index: {}]
  %s2 = inlined_call_operand.vmem [shape: f32[20,1], index: 2, kind: input, shape index: {}]
  %s3 = inlined_call_operand.hbm [shape: f32[2,8,128], index: 3, kind: output, shape index: {}]
  %s4 = sld [smem:[#allocation0]]
  $region53: #{tpu_custom_call.1} parent=0
    _
  %s6 = ssub.s32 1, %s4
  %s7 = scalar_select 0, %s6, %s4
  $region1: #{tpu_custom_call.1} parent=0
    #allocation2 [shape = 'u8[8192]{0}', space=vmem, size = 0x2000, scoped, tag = 'input window, operand 1']
    #allocation3 [shape = 's32[2]{0}', space=sflag, size = 0x8, scoped, tag = 'scoped memory for tpu_custom_call.1']
    #allocation4 [shape = 's32[2]{0}', space=sflag, size = 0x8, scoped, tag = 'scoped memory for tpu_custom_call.1']
    #allocation5 [shape = 'u8[8192]{0}', space=vmem, size = 0x2000, scoped, tag = 'output window, operand 0']
    %8 = vsyncpa [#allocation3], 0
    %s9 = scalar_lea.sflag [#allocation3], 1
    %10 = vsyncpa %s9, 0
    %11 = vsyncpa [#allocation4], 0
    %s12 = scalar_lea.sflag [#allocation4], 1
    %13 = vsyncpa %s12, 0
    loop: start=0, step=1, limit=6
    $region2: #{tpu_custom_call.1} parent=1 // loop_pre_header
      _
    $region3: #{tpu_custom_call.1} parent=1 // loop_header
      %s15 = sphi 0, %s19
      %p16 = scmp.ge.s32.totalorder %s15, 6
      %s22 = sphi 0, %s34
      %s23 = sphi 0, %s30
      %s24 = sphi 0, %s22
      %s25 = sphi 0, %s23
      %s26 = sphi 0, %s24
      %s27 = sphi 0, %s25
      %s45 = sphi 0, %s47
      %s48 = sphi 0, %s45
      %s49 = sphi 0, %s48
      %s65 = sphi 0, %s49
      %s79 = sphi 0, %s81
      %s82 = sphi 0, %s79
      %s83 = sphi 0, %s82
      %s99 = sphi 0, %s83
      %s113 = sphi 0, %s115
      %s116 = sphi 0, %s113
      %s117 = sphi 0, %s116
      %s133 = sphi 0, %s117
      %s139 = sphi 0, %s141
      %s142 = sphi 0, %s139
      %s143 = sphi 0, %s142
      %s159 = sphi 0, %s143
    $region4: #{tpu_custom_call.1} parent=1 // loop_header_branch
      %18 = sbr.rel (%p16) target = $region8
    $region5: #{tpu_custom_call.1} parent=1 // loop_body
      %s20 = ssub.s32 %s15, 1
      %s21 = ssub.s32 %s15, 2
      %s28 = sadd.s32 1, %s23
      %p29 = scmp.ge.s32.totalorder %s28, 2
      %s30 = scalar_select %p29, 0, %s28
      %s31 = sadd.s32 1, %s22
      %s32 = scalar_select %p29, %s31, %s22
      %p33 = scmp.ge.s32.totalorder %s32, 2
      %s34 = scalar_select %p33, 0, %s32
      %s35 = smul.u32 %s22, 2
      %s36 = sadd.s32 %s35, %s23
      %p37 = scmp.lt.s32.totalorder %s36, 2
      %s38 = scalar_select %p37, %s36, 2
      %s39 = smul.u32 %s34, 2
      %s40 = sadd.s32 %s39, %s30
      %p41 = scmp.lt.s32.totalorder %s40, 2
      %s42 = scalar_select %p41, %s40, 2
      %s43 = ssub.s32 %s38, %s42
      %p44 = scmp.eq.s32.totalorder %s43, 0
      %s46 = sadd.s32 %s45, 1
      %s47 = scalar_select %p44, %s45, %s46
      %p50 = pneg %p44
      %p51 = scmp.eq.s32.totalorder %s15, 3
      %p52 = por %p50, %p51
      %p53 = scmp.ne.s32.totalorder %s45, %s48
      %p54 = scmp.eq.s32.totalorder %s15, 0
      %p55 = por %p53, %p54
      %p56 = scmp.ne.s32.totalorder %s45, %s48
      %p57 = scmp.eq.s32.totalorder %s20, 3
      %p58 = por %p56, %p57
      %p59 = scmp.ne.s32.totalorder %s48, %s49
      %p60 = scmp.eq.s32.totalorder %s20, 0
      %p61 = por %p59, %p60
      %p62 = scmp.ne.s32.totalorder %s48, %s49
      %p63 = scmp.eq.s32.totalorder %s21, 3
      %p64 = por %p62, %p63
      %p66 = scmp.ne.s32.totalorder %s49, %s65
      %p67 = scmp.eq.s32.totalorder %s21, 0
      %p68 = por %p66, %p67
      %s69 = smul.u32 %s22, 2
      %s70 = sadd.s32 %s69, %s23
      %p71 = scmp.lt.s32.totalorder %s70, 2
      %s72 = scalar_select %p71, %s70, 2
      %s73 = smul.u32 %s34, 2
      %s74 = sadd.s32 %s73, %s30
      %p75 = scmp.lt.s32.totalorder %s74, 2
      %s76 = scalar_select %p75, %s74, 2
      %s77 = ssub.s32 %s72, %s76
      %p78 = scmp.eq.s32.totalorder %s77, 0
      %s80 = sadd.s32 %s79, 1
      %s81 = scalar_select %p78, %s79, %s80
      %p84 = pneg %p78
      %p85 = scmp.eq.s32.totalorder %s15, 3
      %p86 = por %p84, %p85
      %p87 = scmp.ne.s32.totalorder %s79, %s82
      %p88 = scmp.eq.s32.totalorder %s15, 0
      %p89 = por %p87, %p88
      %p90 = scmp.ne.s32.totalorder %s79, %s82
      %p91 = scmp.eq.s32.totalorder %s20, 3
      %p92 = por %p90, %p91
      %p93 = scmp.ne.s32.totalorder %s82, %s83
      %p94 = scmp.eq.s32.totalorder %s20, 0
      %p95 = por %p93, %p94
      %p96 = scmp.ne.s32.totalorder %s82, %s83
      %p97 = scmp.eq.s32.totalorder %s21, 3
      %p98 = por %p96, %p97
      %p100 = scmp.ne.s32.totalorder %s83, %s99
      %p101 = scmp.eq.s32.totalorder %s21, 0
      %p102 = por %p100, %p101
      %s103 = smul.u32 %s22, 2
      %s104 = sadd.s32 %s103, %s23
      %p105 = scmp.lt.s32.totalorder %s104, 2
      %s106 = scalar_select %p105, %s104, 2
      %s107 = smul.u32 %s34, 2
      %s108 = sadd.s32 %s107, %s30
      %p109 = scmp.lt.s32.totalorder %s108, 2
      %s110 = scalar_select %p109, %s108, 2
      %s111 = ssub.s32 %s106, %s110
      %p112 = scmp.eq.s32.totalorder %s111, 0
      %s114 = sadd.s32 %s113, 1
      %s115 = scalar_select %p112, %s113, %s114
      %p118 = pneg %p112
      %p119 = scmp.eq.s32.totalorder %s15, 3
      %p120 = por %p118, %p119
      %p121 = scmp.ne.s32.totalorder %s113, %s116
      %p122 = scmp.eq.s32.totalorder %s15, 0
      %p123 = por %p121, %p122
      %p124 = scmp.ne.s32.totalorder %s113, %s116
      %p125 = scmp.eq.s32.totalorder %s20, 3
      %p126 = por %p124, %p125
      %p127 = scmp.ne.s32.totalorder %s116, %s117
      %p128 = scmp.eq.s32.totalorder %s20, 0
      %p129 = por %p127, %p128
      %p130 = scmp.ne.s32.totalorder %s116, %s117
      %p131 = scmp.eq.s32.totalorder %s21, 3
      %p132 = por %p130, %p131
      %p134 = scmp.ne.s32.totalorder %s117, %s133
      %p135 = scmp.eq.s32.totalorder %s21, 0
      %p136 = por %p134, %p135
      %s137 = ssub.s32 %s22, %s34
      %p138 = scmp.eq.s32.totalorder %s137, 0
      %s140 = sadd.s32 %s139, 1
      %s141 = scalar_select %p138, %s139, %s140
      %p144 = pneg %p138
      %p145 = scmp.eq.s32.totalorder %s15, 3
      %p146 = por %p144, %p145
      %p147 = scmp.ne.s32.totalorder %s139, %s142
      %p148 = scmp.eq.s32.totalorder %s15, 0
      %p149 = por %p147, %p148
      %p150 = scmp.ne.s32.totalorder %s139, %s142
      %p151 = scmp.eq.s32.totalorder %s20, 3
      %p152 = por %p150, %p151
      %p153 = scmp.ne.s32.totalorder %s142, %s143
      %p154 = scmp.eq.s32.totalorder %s20, 0
      %p155 = por %p153, %p154
      %p156 = scmp.ne.s32.totalorder %s142, %s143
      %p157 = scmp.eq.s32.totalorder %s21, 3
      %p158 = por %p156, %p157
      %p160 = scmp.ne.s32.totalorder %s143, %s159
      %p161 = scmp.eq.s32.totalorder %s21, 0
      %p162 = por %p160, %p161
      %p163 = scmp.le.s32.totalorder 1, %s15
      %p164 = scmp.lt.s32.totalorder %s15, 5
      %p165 = pnand %p163, %p164
      %p166 = pneg %p165
      // Predicated region
      $region9: #{tpu_custom_call.1} parent=5 // pred_check
        _
      $region10: #{tpu_custom_call.1} parent=5 // pred_check_branch
        %168 = sbr.rel (%p165) target = $region12
      $region11: #{tpu_custom_call.1} parent=5 // pred_region
        %s169 = ssub.s32 %s15, 1
      $region12: #{tpu_custom_call.1} parent=5 // pred_fallthru
        _
      %p170 = scmp.lt.s32.totalorder %s15, 4
      // Predicated region
      $region13: #{tpu_custom_call.1} parent=5 // pred_check
        %p171 = pneg %p170
      $region14: #{tpu_custom_call.1} parent=5 // pred_check_branch
        %173 = sbr.rel (%p171) target = $region16
      $region15: #{tpu_custom_call.1} parent=5 // pred_region
        // Predicated region
        $region17: #{tpu_custom_call.1} parent=15 // pred_check
          %p174 = pneg %p55
        $region18: #{tpu_custom_call.1} parent=15 // pred_check_branch
          %176 = sbr.rel (%p174) target = $region20
        $region19: #{tpu_custom_call.1} parent=15 // pred_region
          %s177 = smul.u32 %s22, 2
          %s178 = sadd.s32 %s177, %s23
          %p179 = scmp.lt.s32.totalorder %s178, 2
          %s180 = scalar_select %p179, %s178, 2
          %p181 = scmp.lt.s32.totalorder %s180, 2
          %s182 = scalar_select %p181, %s180, 2
          %s183 = smul.addr %s182, 8
          %s184 = scalar_lea.vmem %s0, %s183
          %s185 = smul.u32 %s22, 2
          %s186 = sadd.s32 %s185, %s23
          %p187 = scmp.lt.s32.totalorder %s186, 2
          %s188 = scalar_select %p187, %s186, 2
        $region20: #{tpu_custom_call.1} parent=15 // pred_fallthru
          _
        // Predicated region
        $region21: #{tpu_custom_call.1} parent=15 // pred_check
          %p189 = pneg %p89
        $region22: #{tpu_custom_call.1} parent=15 // pred_check_branch
          %191 = sbr.rel (%p189) target = $region24
        $region23: #{tpu_custom_call.1} parent=15 // pred_region
          %s192 = sand.u32 %s79, 1
          %s193 = scalar_lea.sflag [#allocation3], %s192
          %s194 = sand.u32 %s79, 1
          %s195 = smul.addr %s194, 8
          %s196 = scalar_lea.vmem [#allocation2], %s195
          %s197 = smul.u32 %s22, 2
          %s198 = sadd.s32 %s197, %s23
          %p199 = scmp.lt.s32.totalorder %s198, 2
          %s200 = scalar_select %p199, %s198, 2
          %s202 = ssub.s32 128, 128
          %203 = vsyncadd %s193, %s202
          %s204 = smul.addr %s200, 128
          %s205 = scalar_lea.hbm %s1, %s204
          %s207 = sshll.u32 %s196, 4
          %s208 = int_to_ptr.vmem [resolvable:$true] %s207
          %210 = dma.hbm_to_vmem [thread:$0]  %s205, 128, %s208, %s193
        $region24: #{tpu_custom_call.1} parent=15 // pred_fallthru
          _
        // Predicated region
        $region25: #{tpu_custom_call.1} parent=15 // pred_check
          %p211 = pneg %p123
        $region26: #{tpu_custom_call.1} parent=15 // pred_check_branch
          %213 = sbr.rel (%p211) target = $region28
        $region27: #{tpu_custom_call.1} parent=15 // pred_region
          %s214 = smul.u32 %s22, 2
          %s215 = sadd.s32 %s214, %s23
          %p216 = scmp.lt.s32.totalorder %s215, 2
          %s217 = scalar_select %p216, %s215, 2
          %p218 = scmp.lt.s32.totalorder %s217, 2
          %s219 = scalar_select %p218, %s217, 2
          %s220 = smul.addr %s219, 8
          %s221 = scalar_lea.vmem %s2, %s220
          %s222 = smul.u32 %s22, 2
          %s223 = sadd.s32 %s222, %s23
          %p224 = scmp.lt.s32.totalorder %s223, 2
          %s225 = scalar_select %p224, %s223, 2
        $region28: #{tpu_custom_call.1} parent=15 // pred_fallthru
          _
      $region16: #{tpu_custom_call.1} parent=5 // pred_fallthru
        _
      %p226 = scmp.le.s32.totalorder 1, %s15
      %p227 = scmp.lt.s32.totalorder %s15, 5
      %p228 = pnand %p226, %p227
      %p229 = pneg %p228
      // Predicated region
      $region29: #{tpu_custom_call.1} parent=5 // pred_check
        _
      $region30: #{tpu_custom_call.1} parent=5 // pred_check_branch
        %231 = sbr.rel (%p228) target = $region32
      $region31: #{tpu_custom_call.1} parent=5 // pred_region
        %s232 = ssub.s32 %s15, 1
        %s233 = sand.u32 %s82, 1
        %s234 = scalar_lea.sflag [#allocation3], %s233
        %s235 = sand.u32 %s82, 1
        %s236 = smul.addr %s235, 8
        %s237 = scalar_lea.vmem [#allocation2], %s236
        // Predicated region
        $region33: #{tpu_custom_call.1} parent=31 // pred_check
          %p238 = pneg %p95
        $region34: #{tpu_custom_call.1} parent=31 // pred_check_branch
          %240 = sbr.rel (%p238) target = $region36
        $region35: #{tpu_custom_call.1} parent=31 // pred_region
          %241 = dma.done %s234, 128
        $region36: #{tpu_custom_call.1} parent=31 // pred_fallthru
          _
        %s242 = smul.u32 %s24, 2
        %s243 = sadd.s32 %s242, %s25
        %p244 = scmp.lt.s32.totalorder %s243, 2
        %s245 = scalar_select %p244, %s243, 2
        %p246 = scmp.lt.s32.totalorder %s245, 2
        %s247 = scalar_select %p246, %s245, 2
        %s248 = smul.addr %s247, 8
        %s249 = scalar_lea.vmem %s0, %s248
        %p250 = pneg %p61
        %p251 = pneg %p58
        %s252 = sand.u32 %s82, 1
        %s253 = scalar_lea.sflag [#allocation3], %s252
        %s254 = sand.u32 %s82, 1
        %s255 = smul.addr %s254, 8
        %s256 = scalar_lea.vmem [#allocation2], %s255
        %p257 = pneg %p95
        %p258 = pneg %p92
        %s259 = smul.u32 %s24, 2
        %s260 = sadd.s32 %s259, %s25
        %p261 = scmp.lt.s32.totalorder %s260, 2
        %s262 = scalar_select %p261, %s260, 2
        %p263 = scmp.lt.s32.totalorder %s262, 2
        %s264 = scalar_select %p263, %s262, 2
        %s265 = smul.addr %s264, 8
        %s266 = scalar_lea.vmem %s2, %s265
        %p267 = pneg %p129
        %p268 = pneg %p126
        %p269 = pneg %p155
        %p270 = pneg %p152
        %s271 = sand.u32 %s142, 1
        %s272 = scalar_lea.sflag [#allocation4], %s271
        %s273 = sand.u32 %s142, 1
        %s274 = smul.addr %s273, 8
        %s275 = scalar_lea.vmem [#allocation5], %s274
        %s276 = smul.u32 %s24, 2
        %s277 = sadd.s32 %s276, %s25
        %p278 = scmp.lt.s32.totalorder %s277, 2
        %s279 = scalar_select %p278, %s277, 2
        %p280 = scmp.lt.s32.totalorder %s279, 2
        %s281 = scalar_select %p280, %s279, 2
        %s282 = smul.addr %s281, 8
        %s283 = scalar_lea.vmem %s0, %s282
        %s284 = smul.u32 %s24, 2
        %s285 = sadd.s32 %s284, %s25
        %p286 = scmp.lt.s32.totalorder %s285, 2
        %s287 = scalar_select %p286, %s285, 2
        %s288 = smul.u32 %s24, 2
        %s289 = sadd.s32 %s288, %s25
        %p290 = scmp.lt.s32.totalorder %s289, 2
        %s291 = scalar_select %p290, %s289, 2
        %s292 = smul.u32 %s24, 2
        %s293 = sadd.s32 %s292, %s25
        %p294 = scmp.lt.s32.totalorder %s293, 2
        %s295 = scalar_select %p294, %s293, 2
        %p296 = scmp.lt.s32.totalorder %s295, 2
        %s297 = scalar_select %p296, %s295, 2
        %s298 = smul.addr %s297, 8
        %s299 = scalar_lea.vmem %s2, %s298
        %s300 = smul.u32 %s24, 2
        %s301 = sadd.s32 %s300, %s25
        %p302 = scmp.lt.s32.totalorder %s301, 2
        %s303 = scalar_select %p302, %s301, 2
        %p304 = scmp.eq.s32.totalorder %s25, 0
        // Predicated region
        $region37: #{tpu_custom_call.1} parent=31 // pred_check
          %p305 = pneg %p304
        $region38: #{tpu_custom_call.1} parent=31 // pred_check_branch
          %307 = sbr.rel (%p305) target = $region40
        $region39: #{tpu_custom_call.1} parent=31 // pred_region
          %308 = vst [vmem:[%s275] sm:$0xff] 0.0
        $region40: #{tpu_custom_call.1} parent=31 // pred_fallthru
          _
        %v309 = vld [vmem:[%s283] sm:$0xff]
        %v310 = vld [vmem:[%s237] sm:$0xff]
        %v311 = vsub.f32 %v309, %v310
        %v312 = vadd.f32 %v311, 1e-06
        %v313 = vmul.f32 %v312, %v312
        %vm314 = vcmask 261120
        %v315 = vsel %vm314, %v313, 0.0
        %316 = vadd.xlane.f32.xlu0 %v315
        %v317 = vpop.xlane.xlu0 %316
        %v318 = vrsqrt.pop %v317
        %v319 = vmul.f32 %v317, %v318
        %vm320 = vcmp.eq.f32.partialorder %v317, inf
        %v321 = vsel %vm320, %v317, %v319
        %vm322 = vcmp.eq.f32.partialorder %v317, 0.0
        %v323 = vand.u32 %v317, 2147483648
        %v324 = vsel %vm322, %v323, %v321
        %v325 = vld [vmem:[%s299] sm:$0xff]
        %v326 = vsub.f32 2.0, %v324
        %v327 = vmax.f32 %v326, 0.0
        %v328 = vsub.f32 1.0, %v325
        %v329 = vmul.f32 %v328, %v317
        %v330 = vmul.f32 %v325, %v327
        %v331 = vmul.f32 %v330, %v327
        %v332 = vadd.f32 %v329, %v331
        %s333 = smul.u32 %s24, 2
        %s334 = sadd.s32 %s333, %s25
        %v335 = vlaneseq
        %v336 = vshrl.u32 %v335, 7
        %s337 = smul.u32 %s334, 8
        %v338 = vstv %s337
        %v339 = vadd.s32 %v336, %v338
        %vm340 = vcmp.lt.s32.totalorder %v339, 20
        %v341 = vsel %vm340, %v332, 0.0
        %v342 = vld [vmem:[%s275] sm:$0xff]
        %vm343 = vcmask 7168
        %v344 = vsel %vm343, %v341, 0.0
        %345 = vadd.xlane.f32.xlu0 %v344
        %v346 = vpop.xlane.xlu0 %345
        %v347 = vrot.slane %v346, 4
        %v348 = vadd.f32 %v346, %v347
        %v349 = vrot.slane %v348, 2
        %v350 = vadd.f32 %v348, %v349
        %v351 = vrot.slane %v350, 1
        %v352 = vadd.f32 %v350, %v351
        %s353 = vtos %v352
        %v354 = vstv %s353
        %v355 = vadd.f32 %v342, %v354
        %356 = vst [vmem:[%s275] sm:$0xff] %v355
        %s357 = sand.u32 %s142, 1
        %s358 = scalar_lea.sflag [#allocation4], %s357
        %s359 = sand.u32 %s142, 1
        %s360 = smul.addr %s359, 8
        %s361 = scalar_lea.vmem [#allocation5], %s360
        // Predicated region
        $region41: #{tpu_custom_call.1} parent=31 // pred_check
          %p362 = pneg %p152
        $region42: #{tpu_custom_call.1} parent=31 // pred_check_branch
          %364 = sbr.rel (%p362) target = $region44
        $region43: #{tpu_custom_call.1} parent=31 // pred_region
          %s366 = ssub.s32 128, 128
          %367 = vsyncadd %s358, %s366
          %s368 = smul.addr %s24, 128
          %s369 = scalar_lea.hbm %s3, %s368
          %s371 = sshll.u32 %s361, 4
          %s372 = int_to_ptr.vmem [resolvable:$true] %s371
          %374 = dma.vmem_to_hbm [thread:$0]  %s372, 128, %s369, %s358
        $region44: #{tpu_custom_call.1} parent=31 // pred_fallthru
          _
      $region32: #{tpu_custom_call.1} parent=5 // pred_fallthru
        _
      %p375 = scmp.le.s32.totalorder 2, %s15
      // Predicated region
      $region45: #{tpu_custom_call.1} parent=5 // pred_check
        %p376 = pneg %p375
      $region46: #{tpu_custom_call.1} parent=5 // pred_check_branch
        %378 = sbr.rel (%p376) target = $region48
      $region47: #{tpu_custom_call.1} parent=5 // pred_region
        %s379 = ssub.s32 %s15, 2
        // Predicated region
        $region49: #{tpu_custom_call.1} parent=47 // pred_check
          %p380 = pneg %p158
        $region50: #{tpu_custom_call.1} parent=47 // pred_check_branch
          %382 = sbr.rel (%p380) target = $region52
        $region51: #{tpu_custom_call.1} parent=47 // pred_region
          %s383 = sand.u32 %s143, 1
          %s384 = scalar_lea.sflag [#allocation4], %s383
          %s385 = sand.u32 %s143, 1
          %s386 = smul.addr %s385, 8
          %s387 = scalar_lea.vmem [#allocation5], %s386
          %388 = dma.done %s384, 128
        $region52: #{tpu_custom_call.1} parent=47 // pred_fallthru
          _
      $region48: #{tpu_custom_call.1} parent=5 // pred_fallthru
        _
    $region6: #{tpu_custom_call.1} parent=1 // loop_footer
      %s19 = sadd.s32 1, %s15
    $region7: #{tpu_custom_call.1} parent=1 // loop_footer_branch
      %14 = sbr.rel target = $region3
    $region8: #{tpu_custom_call.1} parent=1 // loop_exit
      _
    %389 = vsyncpa [#allocation3], 1
    %s390 = scalar_lea.sflag [#allocation3], 1
    %391 = vsyncpa %s390, 1
    %392 = vsyncpa [#allocation4], 1
    %s393 = scalar_lea.sflag [#allocation4], 1
    %394 = vsyncpa %s393, 1

</llo_original>
